<compile_context>
chip_gen: v5e
topology: v5e:2x2
jax: 0.10.0
libtpu: 0.0.40
codegen_flags: <defaults>
</compile_context>

<pallas_src>
import jax
import jax.numpy as jnp
from jax.experimental import pallas as pl
from jax.experimental.pallas import tpu as pltpu


def rope_kernel(pos_ref, inv_ref, cos_ref, sin_ref):
    # pos_ref: (tm, 1) int32 positions; inv_ref: (1, dim) f32 duplicated inv_freq.
    emb = pos_ref[...].astype(jnp.float32) * inv_ref[...]   # broadcast -> (tm, dim) f32
    cos_ref[...] = jnp.cos(emb).astype(cos_ref.dtype)
    sin_ref[...] = jnp.sin(emb).astype(sin_ref.dtype)


def gemma_rotary_embedding(x, position_ids, inv_freq, *, tm=2048):
    """x: any array (dtype source); position_ids: (B, S) int; inv_freq: (dim//2,) f32."""
    B, S = position_ids.shape
    half = inv_freq.shape[0]
    dim = 2 * half
    M = B * S
    out_dtype = x.dtype

    # Row tile: multiple of the f32 sublane (8).  Clamp so that
    #   - tm never exceeds ceil(M/2) rounded up to 8  -> grid has >= 2 steps
    #     whenever M > 8 (keeps both v7x TensorCores fed),
    #   - tm >= 8 always.
    tm = max(8, min(tm, 8 * pl.cdiv(pl.cdiv(M, 2), 8)))
    grid = pl.cdiv(M, tm)          # ragged last block handled by Pallas; no padding

    pos = position_ids.reshape(M, 1)                          # int32, cast in-kernel
    inv_dup = jnp.concatenate([inv_freq, inv_freq]).astype(jnp.float32).reshape(1, dim)

    # Only raise the scoped-VMEM limit if a large user tile actually needs it
    # (2 outputs x 2 pipeline buffers + f32 emb temp + positions).
    itemsize = jnp.dtype(out_dtype).itemsize
    working_bytes = 2 * (2 * tm * dim * itemsize) + tm * dim * 4 + 8 * tm
    vmem_limit = None
    if working_bytes > 12 * 1024 * 1024:
        vmem_limit = min(64 * 1024 * 1024, 2 * working_bytes)

    cos, sin = pl.pallas_call(
        rope_kernel,
        out_shape=(jax.ShapeDtypeStruct((M, dim), out_dtype),
                   jax.ShapeDtypeStruct((M, dim), out_dtype)),
        grid_spec=pltpu.PrefetchScalarGridSpec(
            num_scalar_prefetch=0,
            grid=(grid,),
            in_specs=[
                pl.BlockSpec((tm, 1), lambda i: (i, 0)),    # positions (row tile)
                pl.BlockSpec((1, dim), lambda i: (0, 0)),   # inv_freq (tiny, constant index)
            ],
            out_specs=[
                pl.BlockSpec((tm, dim), lambda i: (i, 0)),  # cos
                pl.BlockSpec((tm, dim), lambda i: (i, 0)),  # sin
            ],
        ),
        compiler_params=pltpu.CompilerParams(
            dimension_semantics=("parallel",),
            vmem_limit_bytes=vmem_limit,
        ),
    )(pos, inv_dup)

    return cos.reshape(B, S, dim), sin.reshape(B, S, dim)


def gemma_rotary_embedding_ref(x, position_ids, inv_freq):
    pos = position_ids.astype(jnp.float32)                               # (B, S)
    freqs = pos[:, :, None] * inv_freq[None, None, :].astype(jnp.float32)
    emb = jnp.concatenate([freqs, freqs], axis=-1)                       # (B, S, dim)
    return jnp.cos(emb).astype(x.dtype), jnp.sin(emb).astype(x.dtype)


if __name__ == "__main__":
    # Small config consistent with GemmaRotaryEmbedding.__init__
    batch, seq = 2, 8
    dim = 128                      # head_dim; keeps the output last dim lane-dense
    max_position_embeddings = 2048
    base = 10000.0

    # Buffer computed exactly as in the module's __init__.
    inv_freq = 1.0 / (base ** (jnp.arange(0, dim, 2, dtype=jnp.float32) / dim))

    key = jax.random.PRNGKey(0)
    kx, kp = jax.random.split(key)
    x = jax.random.normal(kx, (batch, seq, dim), dtype=jnp.float32)  # only dtype is used
    position_ids = jax.random.randint(
        kp, (batch, seq), 0, max_position_embeddings, dtype=jnp.int32)

    cos, sin = gemma_rotary_embedding(x, position_ids, inv_freq)
    cos = jax.block_until_ready(cos)
    sin = jax.block_until_ready(sin)

    cos_ref, sin_ref = gemma_rotary_embedding_ref(x, position_ids, inv_freq)
    assert cos.shape == (batch, seq, dim) and sin.shape == (batch, seq, dim)
    assert cos.dtype == x.dtype and sin.dtype == x.dtype
    assert jnp.allclose(cos, cos_ref, atol=1e-4, rtol=1e-4)
    assert jnp.allclose(sin, sin_ref, atol=1e-4, rtol=1e-4)

    print("KERNEL_OK")
</pallas_src>

<mosaic_0001>
module attributes {stable_mosaic.version = 11 : i64} {
  func.func @rope_kernel(%arg0: i32, %arg1: memref<8x1xi32, #tpu.memory_space<vmem>>, %arg2: memref<1x128xf32, #tpu.memory_space<vmem>>, %arg3: memref<8x128xf32, #tpu.memory_space<vmem>>, %arg4: memref<8x128xf32, #tpu.memory_space<vmem>>) attributes {dimension_semantics = [#tpu.dimension_semantics<parallel>], iteration_bounds = array<i64: 2>, scalar_prefetch = 0 : i64, scratch_operands = 0 : i64, tpu.core_type = #tpu.core_type<tc>, window_params = [{transform_indices = @transform_0, window_bounds = array<i64: 8, 1>}, {pipeline_mode = #tpu.pipeline_mode<synchronous>, transform_indices = @transform_1, window_bounds = array<i64: 1, 128>}, {transform_indices = @transform_2, window_bounds = array<i64: 8, 128>}, {transform_indices = @transform_3, window_bounds = array<i64: 8, 128>}]} {
    %c0 = arith.constant 0 : index
    %c0_0 = arith.constant 0 : index
    %0 = vector.load %arg1[%c0, %c0_0] : memref<8x1xi32, #tpu.memory_space<vmem>>, vector<8x1xi32>
    %1 = arith.sitofp %0 : vector<8x1xi32> to vector<8x1xf32>
    %c0_1 = arith.constant 0 : index
    %c0_2 = arith.constant 0 : index
    %2 = vector.load %arg2[%c0_1, %c0_2] : memref<1x128xf32, #tpu.memory_space<vmem>>, vector<1x128xf32>
    %3 = vector.broadcast %1 : vector<8x1xf32> to vector<8x128xf32>
    %4 = vector.broadcast %2 : vector<1x128xf32> to vector<8x128xf32>
    %5 = arith.mulf %3, %4 : vector<8x128xf32>
    %6 = math.cos %5 : vector<8x128xf32>
    %c0_3 = arith.constant 0 : index
    %c0_4 = arith.constant 0 : index
    %7 = vector.load %arg3[%c0_3, %c0_4] : memref<8x128xf32, #tpu.memory_space<vmem>>, vector<8x128xf32>
    tpu.vector_store %arg3[%c0_3, %c0_4], %6 {strides = array<i32>} : memref<8x128xf32, #tpu.memory_space<vmem>>, vector<8x128xf32>,
    %8 = math.sin %5 : vector<8x128xf32>
    %c0_5 = arith.constant 0 : index
    %c0_6 = arith.constant 0 : index
    %9 = vector.load %arg4[%c0_5, %c0_6] : memref<8x128xf32, #tpu.memory_space<vmem>>, vector<8x128xf32>
    tpu.vector_store %arg4[%c0_5, %c0_6], %8 {strides = array<i32>} : memref<8x128xf32, #tpu.memory_space<vmem>>, vector<8x128xf32>,
    return
  }
  func.func @transform_0(%arg0: i32) -> (i32, i32) {
    %c0_i32 = arith.constant 0 : i32
    %c0_i32_0 = arith.constant 0 : i32
    return %arg0, %c0_i32 : i32, i32
  }
  func.func @transform_1(%arg0: i32) -> (i32, i32) {
    %c0_i32 = arith.constant 0 : i32
    %c0_i32_0 = arith.constant 0 : i32
    %c0_i32_1 = arith.constant 0 : i32
    return %c0_i32, %c0_i32_0 : i32, i32
  }
  func.func @transform_2(%arg0: i32) -> (i32, i32) {
    %c0_i32 = arith.constant 0 : i32
    %c0_i32_0 = arith.constant 0 : i32
    return %arg0, %c0_i32 : i32, i32
  }
  func.func @transform_3(%arg0: i32) -> (i32, i32) {
    %c0_i32 = arith.constant 0 : i32
    %c0_i32_0 = arith.constant 0 : i32
    return %arg0, %c0_i32 : i32, i32
  }
}

</mosaic_0001>

<llo_original>
// kernel: tpu_custom_call.1
$region0: #{tpu_custom_call.1}
  #allocation0 [shape = 'u32[]', space=smem, size = 0x4, offset = 0x4, fixed_abs, tag = 'smem constant byte address 0x4 - core index']
  #allocation1 [shape = 'u32[72,128]{1,0:T(1,128)}', space=vmem, size = 0x9000, scoped, tag = 'internal scratch']
  %s0 = inlined_call_operand.vmem [shape: s32[16,1], index: 0, kind: input, shape index: {}]
  %s1 = inlined_call_operand.vmem [shape: f32[1,128], index: 1, kind: input, shape index: {}]
  %s2 = inlined_call_operand.hbm [shape: f32[16,128], index: 2, kind: output, shape index: {0}]
  %s3 = inlined_call_operand.hbm [shape: f32[16,128], index: 3, kind: output, shape index: {1}]
  %4 = xla_tuple %s2, %s3
  %s5 = sld [smem:[#allocation0]]
  $region49: #{tpu_custom_call.1} parent=0
    _
  %s7 = ssub.s32 1, %s5
  %s8 = scalar_select 0, %s7, %s5
  $region1: #{tpu_custom_call.1} parent=0
    #allocation2 [shape = 'u8[8192]{0}', space=vmem, size = 0x2000, scoped, tag = 'output window, operand 0']
    #allocation3 [shape = 's32[2]{0}', space=sflag, size = 0x8, scoped, tag = 'scoped memory for tpu_custom_call.1']
    #allocation4 [shape = 'u8[8192]{0}', space=vmem, size = 0x2000, scoped, tag = 'output window, operand 1']
    #allocation5 [shape = 's32[2]{0}', space=sflag, size = 0x8, scoped, tag = 'scoped memory for tpu_custom_call.1']
    %9 = vsyncpa [#allocation3], 0
    %s10 = scalar_lea.sflag [#allocation3], 1
    %11 = vsyncpa %s10, 0
    %12 = vsyncpa [#allocation5], 0
    %s13 = scalar_lea.sflag [#allocation5], 1
    %14 = vsyncpa %s13, 0
    loop: start=0, step=1, limit=4
    $region2: #{tpu_custom_call.1} parent=1 // loop_pre_header
      _
    $region3: #{tpu_custom_call.1} parent=1 // loop_header
      %s16 = sphi 0, %s20
      %p17 = scmp.ge.s32.totalorder %s16, 4
      %s26 = sphi 0, %s28
      %s29 = sphi 0, %s26
      %s30 = sphi 0, %s29
      %s46 = sphi 0, %s30
      %s50 = sphi 0, %s50
      %s52 = sphi 0, %s50
      %s53 = sphi 0, %s52
      %s67 = sphi 0, %s53
      %s73 = sphi 0, %s75
      %s76 = sphi 0, %s73
      %s77 = sphi 0, %s76
      %s93 = sphi 0, %s77
      %s99 = sphi 0, %s101
      %s102 = sphi 0, %s99
      %s103 = sphi 0, %s102
      %s119 = sphi 0, %s103
    $region4: #{tpu_custom_call.1} parent=1 // loop_header_branch
      %19 = sbr.rel (%p17) target = $region8
    $region5: #{tpu_custom_call.1} parent=1 // loop_body
      %s21 = ssub.s32 %s16, 1
      %s22 = ssub.s32 %s16, 2
      %s23 = sadd.s32 %s16, 1
      %s24 = ssub.s32 %s16, %s23
      %p25 = scmp.eq.s32.totalorder %s24, 0
      %s27 = sadd.s32 %s26, 1
      %s28 = scalar_select %p25, %s26, %s27
      %p31 = pneg %p25
      %p32 = scmp.eq.s32.totalorder %s16, 1
      %p33 = por %p31, %p32
      %p34 = scmp.ne.s32.totalorder %s26, %s29
      %p35 = scmp.eq.s32.totalorder %s16, 0
      %p36 = por %p34, %p35
      %p37 = scmp.ne.s32.totalorder %s26, %s29
      %p38 = scmp.eq.s32.totalorder %s21, 1
      %p39 = por %p37, %p38
      %p40 = scmp.ne.s32.totalorder %s29, %s30
      %p41 = scmp.eq.s32.totalorder %s21, 0
      %p42 = por %p40, %p41
      %p43 = scmp.ne.s32.totalorder %s29, %s30
      %p44 = scmp.eq.s32.totalorder %s22, 1
      %p45 = por %p43, %p44
      %p47 = scmp.ne.s32.totalorder %s30, %s46
      %p48 = scmp.eq.s32.totalorder %s22, 0
      %p49 = por %p47, %p48
      %s51 = sadd.s32 %s50, 1
      %p54 = scmp.eq.s32.totalorder %s16, 1
      %p55 = scmp.ne.s32.totalorder %s50, %s52
      %p56 = scmp.eq.s32.totalorder %s16, 0
      %p57 = por %p55, %p56
      %p58 = scmp.ne.s32.totalorder %s50, %s52
      %p59 = scmp.eq.s32.totalorder %s21, 1
      %p60 = por %p58, %p59
      %p61 = scmp.ne.s32.totalorder %s52, %s53
      %p62 = scmp.eq.s32.totalorder %s21, 0
      %p63 = por %p61, %p62
      %p64 = scmp.ne.s32.totalorder %s52, %s53
      %p65 = scmp.eq.s32.totalorder %s22, 1
      %p66 = por %p64, %p65
      %p68 = scmp.ne.s32.totalorder %s53, %s67
      %p69 = scmp.eq.s32.totalorder %s22, 0
      %p70 = por %p68, %p69
      %s71 = ssub.s32 %s16, %s23
      %p72 = scmp.eq.s32.totalorder %s71, 0
      %s74 = sadd.s32 %s73, 1
      %s75 = scalar_select %p72, %s73, %s74
      %p78 = pneg %p72
      %p79 = scmp.eq.s32.totalorder %s16, 1
      %p80 = por %p78, %p79
      %p81 = scmp.ne.s32.totalorder %s73, %s76
      %p82 = scmp.eq.s32.totalorder %s16, 0
      %p83 = por %p81, %p82
      %p84 = scmp.ne.s32.totalorder %s73, %s76
      %p85 = scmp.eq.s32.totalorder %s21, 1
      %p86 = por %p84, %p85
      %p87 = scmp.ne.s32.totalorder %s76, %s77
      %p88 = scmp.eq.s32.totalorder %s21, 0
      %p89 = por %p87, %p88
      %p90 = scmp.ne.s32.totalorder %s76, %s77
      %p91 = scmp.eq.s32.totalorder %s22, 1
      %p92 = por %p90, %p91
      %p94 = scmp.ne.s32.totalorder %s77, %s93
      %p95 = scmp.eq.s32.totalorder %s22, 0
      %p96 = por %p94, %p95
      %s97 = ssub.s32 %s16, %s23
      %p98 = scmp.eq.s32.totalorder %s97, 0
      %s100 = sadd.s32 %s99, 1
      %s101 = scalar_select %p98, %s99, %s100
      %p104 = pneg %p98
      %p105 = scmp.eq.s32.totalorder %s16, 1
      %p106 = por %p104, %p105
      %p107 = scmp.ne.s32.totalorder %s99, %s102
      %p108 = scmp.eq.s32.totalorder %s16, 0
      %p109 = por %p107, %p108
      %p110 = scmp.ne.s32.totalorder %s99, %s102
      %p111 = scmp.eq.s32.totalorder %s21, 1
      %p112 = por %p110, %p111
      %p113 = scmp.ne.s32.totalorder %s102, %s103
      %p114 = scmp.eq.s32.totalorder %s21, 0
      %p115 = por %p113, %p114
      %p116 = scmp.ne.s32.totalorder %s102, %s103
      %p117 = scmp.eq.s32.totalorder %s22, 1
      %p118 = por %p116, %p117
      %p120 = scmp.ne.s32.totalorder %s103, %s119
      %p121 = scmp.eq.s32.totalorder %s22, 0
      %p122 = por %p120, %p121
      %p123 = scmp.le.s32.totalorder 1, %s16
      %p124 = scmp.lt.s32.totalorder %s16, 3
      %p125 = pnand %p123, %p124
      %p126 = pneg %p125
      // Predicated region
      $region9: #{tpu_custom_call.1} parent=5 // pred_check
        _
      $region10: #{tpu_custom_call.1} parent=5 // pred_check_branch
        %128 = sbr.rel (%p125) target = $region12
      $region11: #{tpu_custom_call.1} parent=5 // pred_region
        %s129 = ssub.s32 %s16, 1
        // Predicated region
        $region13: #{tpu_custom_call.1} parent=11 // pred_check
          %p130 = pneg %p63
        $region14: #{tpu_custom_call.1} parent=11 // pred_check_branch
          %132 = sbr.rel (%p130) target = $region16
        $region15: #{tpu_custom_call.1} parent=11 // pred_region
          _
        $region16: #{tpu_custom_call.1} parent=11 // pred_fallthru
          _
      $region12: #{tpu_custom_call.1} parent=5 // pred_fallthru
        _
      %p133 = scmp.lt.s32.totalorder %s16, 2
      // Predicated region
      $region17: #{tpu_custom_call.1} parent=5 // pred_check
        %p134 = pneg %p133
      $region18: #{tpu_custom_call.1} parent=5 // pred_check_branch
        %136 = sbr.rel (%p134) target = $region20
      $region19: #{tpu_custom_call.1} parent=5 // pred_region
        // Predicated region
        $region21: #{tpu_custom_call.1} parent=19 // pred_check
          %p137 = pneg %p36
        $region22: #{tpu_custom_call.1} parent=19 // pred_check_branch
          %139 = sbr.rel (%p137) target = $region24
        $region23: #{tpu_custom_call.1} parent=19 // pred_region
          %p140 = scmp.lt.s32.totalorder %s16, 1
          %s141 = scalar_select %p140, %s16, 1
          %s142 = smul.addr %s141, 8
          %s143 = scalar_lea.vmem %s0, %s142
        $region24: #{tpu_custom_call.1} parent=19 // pred_fallthru
          _
      $region20: #{tpu_custom_call.1} parent=5 // pred_fallthru
        _
      %p144 = scmp.le.s32.totalorder 1, %s16
      %p145 = scmp.lt.s32.totalorder %s16, 3
      %p146 = pnand %p144, %p145
      %p147 = pneg %p146
      // Predicated region
      $region25: #{tpu_custom_call.1} parent=5 // pred_check
        _
      $region26: #{tpu_custom_call.1} parent=5 // pred_check_branch
        %149 = sbr.rel (%p146) target = $region28
      $region27: #{tpu_custom_call.1} parent=5 // pred_region
        %s150 = ssub.s32 %s16, 1
        %p151 = scmp.lt.s32.totalorder %s21, 1
        %s152 = scalar_select %p151, %s21, 1
        %s153 = smul.addr %s152, 8
        %s154 = scalar_lea.vmem %s0, %s153
        %p155 = pneg %p42
        %p156 = pneg %p39
        %p157 = pneg %p63
        %p158 = pneg %p60
        %p159 = pneg %p89
        %p160 = pneg %p86
        %s161 = sand.u32 %s76, 1
        %s162 = scalar_lea.sflag [#allocation3], %s161
        %s163 = sand.u32 %s76, 1
        %s164 = smul.addr %s163, 8
        %s165 = scalar_lea.vmem [#allocation2], %s164
        %p166 = pneg %p115
        %p167 = pneg %p112
        %s168 = sand.u32 %s102, 1
        %s169 = scalar_lea.sflag [#allocation5], %s168
        %s170 = sand.u32 %s102, 1
        %s171 = smul.addr %s170, 8
        %s172 = scalar_lea.vmem [#allocation4], %s171
        %p173 = scmp.lt.s32.totalorder %s21, 1
        %s174 = scalar_select %p173, %s21, 1
        %s175 = smul.addr %s174, 8
        %s176 = scalar_lea.vmem %s0, %s175
        %v177 = vld [vmem:[%s176] sm:$0xff]
        %v178 = vcvt.s32.f32 %v177
        %v179 = vld [vmem:[%s1] sm:$0x1]
        %181 = vset.pattern.permute.xlu0 0
        %182 = vperm.xlu0 %181, %v178
        %v183 = vpop.permute.xlu0 %182
        %v186 = vperm.slane %v179, 0
        %v188 = vmul.f32 %v183, %v186
        %v189 = vand.u32 2147483647, %v188
        %vm190 = vcmp.le.f32.partialorder %v189, 0.7853982
        %vm191 = vcmp.lt.s32.totalorder %v188, 0
        %v192 = vand.u32 %v188, 2139095040
        %v193 = vshrl.u32 %v192, 23
        %v194 = vsub.s32 %v193, 127
        %v195 = vand.u32 2147483647, %v188
        %v196 = vand.u32 %v195, 8388607
        %v197 = vor.u32 %v196, 8388608
        %v198 = vsub.s32 0, %v197
        %v199 = vadd.s32 %v194, 1
        %vm200 = vcmp.gt.s32.totalorder %v199, 0
        %v201 = vsel %vm200, %v199, 0
        %v202 = vshrl.u32 %v201, 5
        %v203 = vand.u32 %v201, 31
        %v204 = vsub.s32 32, %v203
        %v205 = vshrl.u32 683565275, %v204
        %v206 = vshll.u32 683565275, %v203
        %v207 = vshrl.u32 2475754826, %v204
        %v208 = vor.u32 %v206, %v207
        %v209 = vshll.u32 2475754826, %v203
        %v210 = vshrl.u32 2131351028, %v204
        %v211 = vor.u32 %v209, %v210
        %v212 = vshll.u32 2131351028, %v203
        %v213 = vshrl.u32 2102212464, %v204
        %v214 = vor.u32 %v212, %v213
        %v215 = vshll.u32 2102212464, %v203
        %v216 = vshrl.u32 920167782, %v204
        %v217 = vor.u32 %v215, %v216
        %v218 = vshll.u32 920167782, %v203
        %v219 = vshrl.u32 1326507024, %v204
        %v220 = vor.u32 %v218, %v219
        %vm221 = vcmp.lt.s32.totalorder %v202, 1
        %vm222 = vcmp.lt.s32.totalorder %v202, 2
        %vm223 = vcmp.lt.s32.totalorder %v202, 3
        %vm224 = vcmp.lt.s32.totalorder %v202, 4
        %v225 = vsel %vm221, %v205, %v208
        %v226 = vsel %vm224, %v214, 2102212464
        %v227 = vsel %vm223, %v211, %v226
        %v228 = vsel %vm222, %v225, %v227
        %v229 = vsel %vm221, %v208, %v211
        %v230 = vsel %vm224, %v217, 920167782
        %v231 = vsel %vm223, %v214, %v230
        %v232 = vsel %vm222, %v229, %v231
        %v233 = vsel %vm221, %v211, %v214
        %v234 = vsel %vm224, %v220, 1326507024
        %v235 = vsel %vm223, %v217, %v234
        %v236 = vsel %vm222, %v233, %v235
        %v237 = vshll.u32 %v197, 8
        %v238 = vand.u32 %v237, 65535
        %v239 = vshrl.u32 %v237, 16
        %v240 = vand.u32 %v236, 65535
        %v241 = vshrl.u32 %v236, 16
        %v242 = vmul.u32 %v238, %v240
        %v243 = vmul.u32 %v238, %v241
        %v244 = vmul.u32 %v239, %v240
        %v245 = vmul.u32 %v239, %v241
        %v246 = vshll.u32 %v243, 16
        %v247 = vshrl.u32 %v243, 16
        %v248 = vshll.u32 %v244, 16
        %v249 = vshrl.u32 %v244, 16
        %vm250 = vc.u32 %v242, %v246
        %v251 = vsel %vm250, 1, 0
        %v252 = vadd.s32 %v242, %v246
        %v253 = vadd.s32 %v245, %v251
        %vm254 = vc.u32 %v252, %v248
        %v255 = vsel %vm254, 1, 0
        %v256 = vadd.s32 %v252, %v248
        %v257 = vadd.s32 %v253, %v255
        %v258 = vadd.s32 %v257, %v247
        %v259 = vadd.s32 %v258, %v249
        %v260 = vand.u32 %v237, 65535
        %v261 = vshrl.u32 %v237, 16
        %v262 = vand.u32 %v232, 65535
        %v263 = vshrl.u32 %v232, 16
        %v264 = vmul.u32 %v260, %v262
        %v265 = vmul.u32 %v260, %v263
        %v266 = vmul.u32 %v261, %v262
        %v267 = vmul.u32 %v261, %v263
        %v268 = vshll.u32 %v265, 16
        %v269 = vshrl.u32 %v265, 16
        %v270 = vshll.u32 %v266, 16
        %v271 = vshrl.u32 %v266, 16
        %vm272 = vc.u32 %v264, %v268
        %v273 = vsel %vm272, 1, 0
        %v274 = vadd.s32 %v264, %v268
        %v275 = vadd.s32 %v267, %v273
        %vm276 = vc.u32 %v274, %v270
        %v277 = vsel %vm276, 1, 0
        %v278 = vadd.s32 %v274, %v270
        %v279 = vadd.s32 %v275, %v277
        %v280 = vadd.s32 %v279, %v269
        %v281 = vadd.s32 %v280, %v271
        %v282 = vmul.u32 %v237, %v228
        %v283 = vadd.s32 %v259, %v278
        %vm284 = vc.u32 %v259, %v278
        %v285 = vadd.s32 %v281, 1
        %v286 = vsel %vm284, %v285, %v281
        %v287 = vadd.s32 %v282, %v286
        %v288 = vadd.s32 %v287, 536870912
        %v289 = vshrl.u32 %v288, 30
        %v290 = vshll.u32 %v289, 30
        %v291 = vsub.s32 %v287, %v290
        %vm292 = vcmp.lt.s32.totalorder %v291, 0
        %v293 = vsub.s32 0, %v291
        %v294 = vsel %vm292, %v293, %v291
        %v295 = vclz %v294
        %v296 = vsub.s32 %v295, 2
        %vm297 = vcmp.gt.s32.totalorder 0, %v296
        %v298 = vsel %vm297, 0, %v296
        %v299 = vsub.s32 32, %v298
        %v300 = vshll.u32 %v291, %v298
        %v301 = vshrl.u32 %v283, %v299
        %v302 = vor.u32 %v300, %v301
        %v303 = vsub.s32 4294967266, %v298
        %v304 = vadd.s32 %v303, 127
        %v305 = vshll.u32 %v304, 23
        %v306 = vor.u32 4788187, %v305
        %v307 = vand.u32 2147483647, %v306
        %v309 = vcvt.s32.f32 %v302
        %v310 = vmul.f32 %v309, %v307
        %v311 = vxor.u32 %v310, 2147483648
        %v312 = vsel %vm191, %v311, %v310
        %v313 = vsub.s32 4, %v289
        %v314 = vsel %vm191, %v313, %v289
        %v315 = vsel %vm190, %v188, %v312
        %v316 = vsel %vm190, 0, %v314
        %v317 = vmul.f32 %v315, %v315
        %v318 = vmul.f32 %v317, -0.001358992
        %v319 = vadd.f32 %v318, 0.041655596
        %v320 = vmul.f32 %v317, %v319
        %v321 = vadd.f32 %v320, -0.4999988
        %v322 = vmul.f32 %v317, %v321
        %v323 = vadd.f32 1.0, %v322
        %v324 = vmul.f32 %v315, %v315
        %v325 = vmul.f32 %v324, -0.00019511016
        %v326 = vadd.f32 %v325, 0.008332121
        %v327 = vmul.f32 %v324, %v326
        %v328 = vadd.f32 %v327, -0.16666654
        %v329 = vmul.f32 %v324, %v328
        %v330 = vadd.f32 %v329, 1.0
        %v331 = vmul.f32 %v330, %v315
        %vm332 = vweird.f32 %v188
        %v333 = vand.u32 %v316, 3
        %vm334 = vcmp.lt.s32.totalorder %v333, 2
        %vm335 = vcmp.eq.s32.totalorder %v333, 0
        %v336 = vxor.u32 %v331, 2147483648
        %v337 = vsel %vm335, %v323, %v336
        %vm338 = vcmp.eq.s32.totalorder %v333, 2
        %v339 = vxor.u32 %v323, 2147483648
        %v340 = vsel %vm338, %v339, %v331
        %v341 = vsel %vm334, %v337, %v340
        %v342 = vsel %vm332, nan, %v341
        %343 = vst [vmem:[%s165] sm:$0xff] %v342
        %v344 = vand.u32 2147483647, %v188
        %vm345 = vcmp.le.f32.partialorder %v344, 0.7853982
        %vm346 = vcmp.lt.s32.totalorder %v188, 0
        %v347 = vand.u32 %v188, 2139095040
        %v348 = vshrl.u32 %v347, 23
        %v349 = vsub.s32 %v348, 127
        %v350 = vand.u32 2147483647, %v188
        %v351 = vand.u32 %v350, 8388607
        %v352 = vor.u32 %v351, 8388608
        %v353 = vsub.s32 0, %v352
        %v354 = vadd.s32 %v349, 1
        %vm355 = vcmp.gt.s32.totalorder %v354, 0
        %v356 = vsel %vm355, %v354, 0
        %v357 = vshrl.u32 %v356, 5
        %v358 = vand.u32 %v356, 31
        %v359 = vsub.s32 32, %v358
        %v360 = vshrl.u32 683565275, %v359
        %v361 = vshll.u32 683565275, %v358
        %v362 = vshrl.u32 2475754826, %v359
        %v363 = vor.u32 %v361, %v362
        %v364 = vshll.u32 2475754826, %v358
        %v365 = vshrl.u32 2131351028, %v359
        %v366 = vor.u32 %v364, %v365
        %v367 = vshll.u32 2131351028, %v358
        %v368 = vshrl.u32 2102212464, %v359
        %v369 = vor.u32 %v367, %v368
        %v370 = vshll.u32 2102212464, %v358
        %v371 = vshrl.u32 920167782, %v359
        %v372 = vor.u32 %v370, %v371
        %v373 = vshll.u32 920167782, %v358
        %v374 = vshrl.u32 1326507024, %v359
        %v375 = vor.u32 %v373, %v374
        %vm376 = vcmp.lt.s32.totalorder %v357, 1
        %vm377 = vcmp.lt.s32.totalorder %v357, 2
        %vm378 = vcmp.lt.s32.totalorder %v357, 3
        %vm379 = vcmp.lt.s32.totalorder %v357, 4
        %v380 = vsel %vm376, %v360, %v363
        %v381 = vsel %vm379, %v369, 2102212464
        %v382 = vsel %vm378, %v366, %v381
        %v383 = vsel %vm377, %v380, %v382
        %v384 = vsel %vm376, %v363, %v366
        %v385 = vsel %vm379, %v372, 920167782
        %v386 = vsel %vm378, %v369, %v385
        %v387 = vsel %vm377, %v384, %v386
        %v388 = vsel %vm376, %v366, %v369
        %v389 = vsel %vm379, %v375, 1326507024
        %v390 = vsel %vm378, %v372, %v389
        %v391 = vsel %vm377, %v388, %v390
        %v392 = vshll.u32 %v352, 8
        %v393 = vand.u32 %v392, 65535
        %v394 = vshrl.u32 %v392, 16
        %v395 = vand.u32 %v391, 65535
        %v396 = vshrl.u32 %v391, 16
        %v397 = vmul.u32 %v393, %v395
        %v398 = vmul.u32 %v393, %v396
        %v399 = vmul.u32 %v394, %v395
        %v400 = vmul.u32 %v394, %v396
        %v401 = vshll.u32 %v398, 16
        %v402 = vshrl.u32 %v398, 16
        %v403 = vshll.u32 %v399, 16
        %v404 = vshrl.u32 %v399, 16
        %vm405 = vc.u32 %v397, %v401
        %v406 = vsel %vm405, 1, 0
        %v407 = vadd.s32 %v397, %v401
        %v408 = vadd.s32 %v400, %v406
        %vm409 = vc.u32 %v407, %v403
        %v410 = vsel %vm409, 1, 0
        %v411 = vadd.s32 %v407, %v403
        %v412 = vadd.s32 %v408, %v410
        %v413 = vadd.s32 %v412, %v402
        %v414 = vadd.s32 %v413, %v404
        %v415 = vand.u32 %v392, 65535
        %v416 = vshrl.u32 %v392, 16
        %v417 = vand.u32 %v387, 65535
        %v418 = vshrl.u32 %v387, 16
        %v419 = vmul.u32 %v415, %v417
        %v420 = vmul.u32 %v415, %v418
        %v421 = vmul.u32 %v416, %v417
        %v422 = vmul.u32 %v416, %v418
        %v423 = vshll.u32 %v420, 16
        %v424 = vshrl.u32 %v420, 16
        %v425 = vshll.u32 %v421, 16
        %v426 = vshrl.u32 %v421, 16
        %vm427 = vc.u32 %v419, %v423
        %v428 = vsel %vm427, 1, 0
        %v429 = vadd.s32 %v419, %v423
        %v430 = vadd.s32 %v422, %v428
        %vm431 = vc.u32 %v429, %v425
        %v432 = vsel %vm431, 1, 0
        %v433 = vadd.s32 %v429, %v425
        %v434 = vadd.s32 %v430, %v432
        %v435 = vadd.s32 %v434, %v424
        %v436 = vadd.s32 %v435, %v426
        %v437 = vmul.u32 %v392, %v383
        %v438 = vadd.s32 %v414, %v433
        %vm439 = vc.u32 %v414, %v433
        %v440 = vadd.s32 %v436, 1
        %v441 = vsel %vm439, %v440, %v436
        %v442 = vadd.s32 %v437, %v441
        %v443 = vadd.s32 %v442, 536870912
        %v444 = vshrl.u32 %v443, 30
        %v445 = vshll.u32 %v444, 30
        %v446 = vsub.s32 %v442, %v445
        %vm447 = vcmp.lt.s32.totalorder %v446, 0
        %v448 = vsub.s32 0, %v446
        %v449 = vsel %vm447, %v448, %v446
        %v450 = vclz %v449
        %v451 = vsub.s32 %v450, 2
        %vm452 = vcmp.gt.s32.totalorder 0, %v451
        %v453 = vsel %vm452, 0, %v451
        %v454 = vsub.s32 32, %v453
        %v455 = vshll.u32 %v446, %v453
        %v456 = vshrl.u32 %v438, %v454
        %v457 = vor.u32 %v455, %v456
        %v458 = vsub.s32 4294967266, %v453
        %v459 = vadd.s32 %v458, 127
        %v460 = vshll.u32 %v459, 23
        %v461 = vor.u32 4788187, %v460
        %v462 = vand.u32 2147483647, %v461
        %v464 = vcvt.s32.f32 %v457
        %v465 = vmul.f32 %v464, %v462
        %v466 = vxor.u32 %v465, 2147483648
        %v467 = vsel %vm346, %v466, %v465
        %v468 = vsub.s32 4, %v444
        %v469 = vsel %vm346, %v468, %v444
        %v470 = vsel %vm345, %v188, %v467
        %v471 = vsel %vm345, 0, %v469
        %v472 = vmul.f32 %v470, %v470
        %v473 = vmul.f32 %v472, -0.001358992
        %v474 = vadd.f32 %v473, 0.041655596
        %v475 = vmul.f32 %v472, %v474
        %v476 = vadd.f32 %v475, -0.4999988
        %v477 = vmul.f32 %v472, %v476
        %v478 = vadd.f32 1.0, %v477
        %v479 = vmul.f32 %v470, %v470
        %v480 = vmul.f32 %v479, -0.00019511016
        %v481 = vadd.f32 %v480, 0.008332121
        %v482 = vmul.f32 %v479, %v481
        %v483 = vadd.f32 %v482, -0.16666654
        %v484 = vmul.f32 %v479, %v483
        %v485 = vadd.f32 %v484, 1.0
        %v486 = vmul.f32 %v485, %v470
        %vm487 = vweird.f32 %v188
        %v488 = vadd.s32 %v471, 3
        %v489 = vand.u32 %v488, 3
        %vm490 = vcmp.lt.s32.totalorder %v489, 2
        %vm491 = vcmp.eq.s32.totalorder %v489, 0
        %v492 = vxor.u32 %v486, 2147483648
        %v493 = vsel %vm491, %v478, %v492
        %vm494 = vcmp.eq.s32.totalorder %v489, 2
        %v495 = vxor.u32 %v478, 2147483648
        %v496 = vsel %vm494, %v495, %v486
        %v497 = vsel %vm490, %v493, %v496
        %v498 = vsel %vm487, nan, %v497
        %499 = vst [vmem:[%s172] sm:$0xff] %v498
        %s500 = sand.u32 %s76, 1
        %s501 = scalar_lea.sflag [#allocation3], %s500
        %s502 = sand.u32 %s76, 1
        %s503 = smul.addr %s502, 8
        %s504 = scalar_lea.vmem [#allocation2], %s503
        %s505 = sand.u32 %s102, 1
        %s506 = scalar_lea.sflag [#allocation5], %s505
        %s507 = sand.u32 %s102, 1
        %s508 = smul.addr %s507, 8
        %s509 = scalar_lea.vmem [#allocation4], %s508
        // Predicated region
        $region29: #{tpu_custom_call.1} parent=27 // pred_check
          %p510 = pneg %p86
        $region30: #{tpu_custom_call.1} parent=27 // pred_check_branch
          %512 = sbr.rel (%p510) target = $region32
        $region31: #{tpu_custom_call.1} parent=27 // pred_region
          %514 = vsyncadd %s501, 0
          %s515 = smul.addr %s21, 8
          %s516 = scalar_lea.hbm %s2, %s515
          %s518 = sshll.u32 %s504, 4
          %s519 = int_to_ptr.vmem [resolvable:$true] %s518
          %s520 = sshll.u32 %s516, 4
          %s521 = int_to_ptr.hbm [resolvable:$true] %s520
          %523 = dma.vmem_to_hbm [thread:$0]  %s519, 128, %s521, %s501
        $region32: #{tpu_custom_call.1} parent=27 // pred_fallthru
          _
        // Predicated region
        $region33: #{tpu_custom_call.1} parent=27 // pred_check
          %p524 = pneg %p112
        $region34: #{tpu_custom_call.1} parent=27 // pred_check_branch
          %526 = sbr.rel (%p524) target = $region36
        $region35: #{tpu_custom_call.1} parent=27 // pred_region
          %528 = vsyncadd %s506, 0
          %s529 = smul.addr %s21, 8
          %s530 = scalar_lea.hbm %s3, %s529
          %s532 = sshll.u32 %s509, 4
          %s533 = int_to_ptr.vmem [resolvable:$true] %s532
          %s534 = sshll.u32 %s530, 4
          %s535 = int_to_ptr.hbm [resolvable:$true] %s534
          %537 = dma.vmem_to_hbm [thread:$0]  %s533, 128, %s535, %s506
        $region36: #{tpu_custom_call.1} parent=27 // pred_fallthru
          _
      $region28: #{tpu_custom_call.1} parent=5 // pred_fallthru
        _
      %p538 = scmp.le.s32.totalorder 2, %s16
      // Predicated region
      $region37: #{tpu_custom_call.1} parent=5 // pred_check
        %p539 = pneg %p538
      $region38: #{tpu_custom_call.1} parent=5 // pred_check_branch
        %541 = sbr.rel (%p539) target = $region40
      $region39: #{tpu_custom_call.1} parent=5 // pred_region
        %s542 = ssub.s32 %s16, 2
        // Predicated region
        $region41: #{tpu_custom_call.1} parent=39 // pred_check
          %p543 = pneg %p92
        $region42: #{tpu_custom_call.1} parent=39 // pred_check_branch
          %545 = sbr.rel (%p543) target = $region44
        $region43: #{tpu_custom_call.1} parent=39 // pred_region
          %s546 = sand.u32 %s77, 1
          %s547 = scalar_lea.sflag [#allocation3], %s546
          %s548 = sand.u32 %s77, 1
          %s549 = smul.addr %s548, 8
          %s550 = scalar_lea.vmem [#allocation2], %s549
          %552 = dma.done %s547, 128
        $region44: #{tpu_custom_call.1} parent=39 // pred_fallthru
          _
        // Predicated region
        $region45: #{tpu_custom_call.1} parent=39 // pred_check
          %p553 = pneg %p118
        $region46: #{tpu_custom_call.1} parent=39 // pred_check_branch
          %555 = sbr.rel (%p553) target = $region48
        $region47: #{tpu_custom_call.1} parent=39 // pred_region
          %s556 = sand.u32 %s103, 1
          %s557 = scalar_lea.sflag [#allocation5], %s556
          %s558 = sand.u32 %s103, 1
          %s559 = smul.addr %s558, 8
          %s560 = scalar_lea.vmem [#allocation4], %s559
          %562 = dma.done %s557, 128
        $region48: #{tpu_custom_call.1} parent=39 // pred_fallthru
          _
      $region40: #{tpu_custom_call.1} parent=5 // pred_fallthru
        _
    $region6: #{tpu_custom_call.1} parent=1 // loop_footer
      %s20 = sadd.s32 1, %s16
    $region7: #{tpu_custom_call.1} parent=1 // loop_footer_branch
      %15 = sbr.rel target = $region3
    $region8: #{tpu_custom_call.1} parent=1 // loop_exit
      _
    %563 = vsyncpa [#allocation3], 1
    %s564 = scalar_lea.sflag [#allocation3], 1
    %565 = vsyncpa %s564, 1
    %566 = vsyncpa [#allocation5], 1
    %s567 = scalar_lea.sflag [#allocation5], 1
    %568 = vsyncpa %s567, 1

</llo_original>
